<compile_context>
chip_gen: v5e
topology: v5e:2x2
jax: 0.10.0
libtpu: 0.0.40
codegen_flags: <defaults>
</compile_context>

<pallas_src>
import functools
import math

import jax
import jax.numpy as jnp
from jax.experimental import pallas as pl
from jax.experimental.pallas import tpu as pltpu


# ----------------------------------------------------------------------------
# Pallas kernel: one grid step == one chunk of T_CHUNK timesteps.
# ----------------------------------------------------------------------------
def _snn_delay_kernel(x_ref, w_x_ref, w_z_ref, w_out_ref, b_out_ref,   # inputs
                      out_ref, spikes_ref, trace_seq_ref,              # outputs
                      z_fin_ref, v_fin_ref, buf_fin_ref,               # final states
                      z_sc, v_sc, trace_sc, buf_sc,                    # VMEM scratch
                      *, t_chunk, decay_trace, alpha, v_th):
    c = pl.program_id(0)
    B, H = z_sc.shape
    DH = buf_sc.shape[1]                      # D * H

    @pl.when(c == 0)
    def _():
        z_sc[...] = jnp.zeros_like(z_sc)
        v_sc[...] = jnp.zeros_like(v_sc)
        trace_sc[...] = jnp.zeros_like(trace_sc)
        buf_sc[...] = jnp.zeros_like(buf_sc)

    # ---- hoisted input-path projection: one MXU matmul, M = t_chunk * B ----
    # x_ref block is (t_chunk*B, IN); xp[t*B:(t+1)*B] is the future current
    # contributed by x_t (columns: delay-d block at [d*H:(d+1)*H]).
    xp = jnp.dot(x_ref[...], w_x_ref[...],
                 preferred_element_type=jnp.float32)       # (t_chunk*B, D*H)

    # ---- hoisted constants (no per-step broadcast re-emission) ----
    w_z = w_z_ref[...]                                     # (H, D*H)
    lane = jax.lax.broadcasted_iota(jnp.int32, (B, DH), 1)
    keep_mask = (lane < (DH - H)).astype(jnp.float32)      # zero last H lanes

    # ---- load recurrent state into values (vregs) ----
    z = z_sc[...]
    v = v_sc[...]
    trace = trace_sc[...]
    buf = buf_sc[...]

    # ---- unrolled recurrence over the chunk (t static) ----
    for t in range(t_chunk):
        # future current buffer from quantized linear-with-delays
        i_fut = xp[t * B:(t + 1) * B, :] + jnp.dot(
            z, w_z, preferred_element_type=jnp.float32)    # (B, D*H)
        buf = buf + i_fut                                  # lane-dense add
        i_t = buf[:, :H]                                   # arriving now

        # shift-left by one delay slot: XLU roll + hoisted mask (no concat)
        buf = pltpu.roll(buf, shift=DH - H, axis=1) * keep_mask

        # LIF membrane update (soft reset) + spike generation
        v = alpha * v + i_t - z * v_th
        z = (v > v_th).astype(jnp.float32)

        # trace = exp_convolve(z, trace, decay_trace)
        trace = decay_trace * trace + (1.0 - decay_trace) * z

        # write into the lane-dense (B, t_chunk*H) output slab (static offsets)
        spikes_ref[:, t * H:(t + 1) * H] = z
        trace_seq_ref[:, t * H:(t + 1) * H] = trace

    # ---- persist state across chunks ----
    z_sc[...] = z
    v_sc[...] = v
    trace_sc[...] = trace
    buf_sc[...] = buf

    # ---- final readout + final states on the last chunk ----
    @pl.when(c == pl.num_programs(0) - 1)
    def _():
        out_ref[...] = (jnp.dot(trace, w_out_ref[...],
                                preferred_element_type=jnp.float32)
                        + b_out_ref[0])
        z_fin_ref[...] = z
        v_fin_ref[...] = v
        buf_fin_ref[...] = buf


# ----------------------------------------------------------------------------
# Wrapper
# ----------------------------------------------------------------------------
def qrecurrent_snn_delay(x_btf, w_rec, w_out, b_out, *, max_delay,
                         decay_trace, alpha, v_th, t_chunk=None):
    """x_btf: (B, T, IN) like the PyTorch module.  Returns
    (output (B,O), spikes (B,T,H), trace (B,T,H), states)."""
    B, T, IN = x_btf.shape
    H, O = w_out.shape
    D = max_delay
    assert w_rec.shape == (IN + H, D * H)

    if t_chunk is None:
        t_chunk = T if T <= 32 else 32
    assert T % t_chunk == 0
    num_chunks = T // t_chunk

    # time-major, flattened to (T*B, IN) so each chunk is one 2-D block
    x_tb_f = jnp.transpose(x_btf, (1, 0, 2)).reshape(T * B, IN)

    # split the concat-matmul:  concat([x, z]) @ w_rec == x @ W_x + z @ W_z
    w_x = w_rec[:IN, :]          # (IN, D*H)
    w_z = w_rec[IN:, :]          # (H, D*H)  (autapse-zeroed rows preserved)

    kernel = functools.partial(_snn_delay_kernel, t_chunk=t_chunk,
                               decay_trace=decay_trace, alpha=alpha, v_th=v_th)

    out_shape = (
        jax.ShapeDtypeStruct((B, O), jnp.float32),          # output
        jax.ShapeDtypeStruct((B, T * H), jnp.float32),      # spikes slab
        jax.ShapeDtypeStruct((B, T * H), jnp.float32),      # trace slab
        jax.ShapeDtypeStruct((B, H), jnp.float32),          # final z
        jax.ShapeDtypeStruct((B, H), jnp.float32),          # final v
        jax.ShapeDtypeStruct((B, D * H), jnp.float32),      # final delay buffer
    )

    grid_spec = pltpu.PrefetchScalarGridSpec(
        num_scalar_prefetch=0,
        grid=(num_chunks,),
        in_specs=[
            pl.BlockSpec((t_chunk * B, IN), lambda c: (c, 0)),   # x (chunked)
            pl.BlockSpec((IN, D * H), lambda c: (0, 0)),         # W_x
            pl.BlockSpec((H, D * H), lambda c: (0, 0)),          # W_z
            pl.BlockSpec((H, O), lambda c: (0, 0)),              # readout weight
            pl.BlockSpec((1, O), lambda c: (0, 0)),              # readout bias
        ],
        out_specs=[
            pl.BlockSpec((B, O), lambda c: (0, 0)),
            pl.BlockSpec((B, t_chunk * H), lambda c: (0, c)),    # lane-dense
            pl.BlockSpec((B, t_chunk * H), lambda c: (0, c)),    # lane-dense
            pl.BlockSpec((B, H), lambda c: (0, 0)),
            pl.BlockSpec((B, H), lambda c: (0, 0)),
            pl.BlockSpec((B, D * H), lambda c: (0, 0)),
        ],
        scratch_shapes=[
            pltpu.VMEM((B, H), jnp.float32),       # z (spikes)
            pltpu.VMEM((B, H), jnp.float32),       # v (membrane)
            pltpu.VMEM((B, H), jnp.float32),       # trace
            pltpu.VMEM((B, D * H), jnp.float32),   # delay buffer
        ],
    )

    out, spikes_slab, trace_slab, z_f, v_f, buf_f = pl.pallas_call(
        kernel,
        out_shape=out_shape,
        grid_spec=grid_spec,
        compiler_params=pltpu.CompilerParams(
            dimension_semantics=("arbitrary",)),     # sequential recurrence
    )(x_tb_f, w_x, w_z, w_out, b_out)

    spikes = spikes_slab.reshape(B, T, H)
    traces = trace_slab.reshape(B, T, H)
    states = (z_f, v_f, buf_f.reshape(B, D, H))
    return out, spikes, traces, states


# ----------------------------------------------------------------------------
# Deterministic parameter construction (synthetic, mirrors __init__ shapes)
# ----------------------------------------------------------------------------
def make_params(key, input_size, hidden_size, output_size, max_delay,
                autapses=False):
    kc, ks, kw = jax.random.split(key, 3)
    fan_in = input_size + hidden_size

    # QLMD: sign matrix + 2 baseweights (rewiring_config['num_baseweights']==2)
    C = jax.random.normal(kc, (max_delay, fan_in, hidden_size), jnp.float32)
    sel = jax.random.bernoulli(ks, 0.5, (max_delay, fan_in, hidden_size))
    bw = jnp.array([1.0 / math.sqrt(fan_in), 0.5 / math.sqrt(fan_in)],
                   jnp.float32)
    W = jnp.sign(C) * jnp.where(sel, bw[1], bw[0])      # (D, IN+H, H)

    if not autapses:
        # zero recurrent self connections for every delay slot
        eye = jnp.eye(hidden_size, dtype=jnp.float32)
        rec = W[:, input_size:, :] * (1.0 - eye)[None, :, :]
        W = W.at[:, input_size:, :].set(rec)

    # flatten to (IN+H, D*H): column block d holds the delay-d weights
    w_rec = jnp.transpose(W, (1, 0, 2)).reshape(fan_in, max_delay * hidden_size)

    # nn.Linear readout: U(-1/sqrt(H), 1/sqrt(H)) weight, zero bias
    bound = 1.0 / math.sqrt(hidden_size)
    w_out = jax.random.uniform(kw, (hidden_size, output_size), jnp.float32,
                               -bound, bound)
    b_out = jnp.zeros((1, output_size), jnp.float32)
    return w_rec, w_out, b_out


# ----------------------------------------------------------------------------
# Pure-JAX reference (same math) for a correctness check
# ----------------------------------------------------------------------------
def reference(x_btf, w_rec, w_out, b_out, *, max_delay, decay_trace, alpha,
              v_th):
    B, T, IN = x_btf.shape
    H, O = w_out.shape
    D = max_delay
    x_tbf = jnp.transpose(x_btf, (1, 0, 2))

    def step(carry, x_t):
        z, v, trace, buf = carry
        inp = jnp.concatenate([x_t, z], axis=1)
        buf = buf + inp @ w_rec
        i_t = buf[:, :H]
        buf = jnp.concatenate([buf[:, H:], jnp.zeros((B, H), jnp.float32)],
                              axis=1)
        v = alpha * v + i_t - z * v_th
        z = (v > v_th).astype(jnp.float32)
        trace = decay_trace * trace + (1.0 - decay_trace) * z
        return (z, v, trace, buf), (z, trace)

    init = (jnp.zeros((B, H)), jnp.zeros((B, H)), jnp.zeros((B, H)),
            jnp.zeros((B, D * H)))
    (z, v, trace, buf), (zs, trs) = jax.lax.scan(step, init, x_tbf)
    out = trace @ w_out + b_out[0]
    return out, jnp.transpose(zs, (1, 0, 2)), jnp.transpose(trs, (1, 0, 2))


if __name__ == "__main__":
    # small shapes consistent with the module's forward
    batch, seq = 4, 8
    input_size = 16
    n_regular, n_adaptive = 24, 8
    hidden = n_regular + n_adaptive          # 32
    output_size = 8
    max_delay = 4                            # rewiring_config['max_delay']
    tau_trace = 20.0
    tau_mem = 20.0
    v_th = 1.0

    decay_trace = math.exp(-1.0 / tau_trace)
    alpha = math.exp(-1.0 / tau_mem)

    key = jax.random.PRNGKey(0)
    kx, kp = jax.random.split(key)
    x = 2.0 * jax.random.normal(kx, (batch, seq, input_size), jnp.float32)
    w_rec, w_out, b_out = make_params(kp, input_size, hidden, output_size,
                                      max_delay, autapses=False)

    out, spikes, traces, states = qrecurrent_snn_delay(
        x, w_rec, w_out, b_out, max_delay=max_delay,
        decay_trace=decay_trace, alpha=alpha, v_th=v_th)
    jax.block_until_ready((out, spikes, traces, states))

    # sanity check against the pure-JAX reference
    out_r, spikes_r, traces_r = reference(
        x, w_rec, w_out, b_out, max_delay=max_delay,
        decay_trace=decay_trace, alpha=alpha, v_th=v_th)
    assert jnp.allclose(out, out_r, atol=1e-5, rtol=1e-5)
    assert jnp.allclose(spikes, spikes_r, atol=1e-5, rtol=1e-5)
    assert jnp.allclose(traces, traces_r, atol=1e-5, rtol=1e-5)

    print("KERNEL_OK")
</pallas_src>

<mosaic_0001>
module attributes {stable_mosaic.version = 11 : i64} {
  func.func @_snn_delay_kernel(%arg0: i32, %arg1: memref<32x16xf32, #tpu.memory_space<vmem>>, %arg2: memref<16x128xf32, #tpu.memory_space<vmem>>, %arg3: memref<32x128xf32, #tpu.memory_space<vmem>>, %arg4: memref<32x8xf32, #tpu.memory_space<vmem>>, %arg5: memref<1x8xf32, #tpu.memory_space<vmem>>, %arg6: memref<4x8xf32, #tpu.memory_space<vmem>>, %arg7: memref<4x256xf32, #tpu.memory_space<vmem>>, %arg8: memref<4x256xf32, #tpu.memory_space<vmem>>, %arg9: memref<4x32xf32, #tpu.memory_space<vmem>>, %arg10: memref<4x32xf32, #tpu.memory_space<vmem>>, %arg11: memref<4x128xf32, #tpu.memory_space<vmem>>, %arg12: memref<4x32xf32, #tpu.memory_space<vmem>>, %arg13: memref<4x32xf32, #tpu.memory_space<vmem>>, %arg14: memref<4x32xf32, #tpu.memory_space<vmem>>, %arg15: memref<4x128xf32, #tpu.memory_space<vmem>>) attributes {dimension_semantics = [#tpu.dimension_semantics<arbitrary>], iteration_bounds = array<i64: 1>, scalar_prefetch = 0 : i64, scratch_operands = 4 : i64, tpu.core_type = #tpu.core_type<tc>, window_params = [{transform_indices = @transform_0, window_bounds = array<i64: 32, 16>}, {pipeline_mode = #tpu.pipeline_mode<synchronous>, transform_indices = @transform_1, window_bounds = array<i64: 16, 128>}, {pipeline_mode = #tpu.pipeline_mode<synchronous>, transform_indices = @transform_2, window_bounds = array<i64: 32, 128>}, {pipeline_mode = #tpu.pipeline_mode<synchronous>, transform_indices = @transform_3, window_bounds = array<i64: 32, 8>}, {pipeline_mode = #tpu.pipeline_mode<synchronous>, transform_indices = @transform_4, window_bounds = array<i64: 1, 8>}, {pipeline_mode = #tpu.pipeline_mode<synchronous>, transform_indices = @transform_5, window_bounds = array<i64: 4, 8>}, {transform_indices = @transform_6, window_bounds = array<i64: 4, 256>}, {transform_indices = @transform_7, window_bounds = array<i64: 4, 256>}, {pipeline_mode = #tpu.pipeline_mode<synchronous>, transform_indices = @transform_8, window_bounds = array<i64: 4, 32>}, {pipeline_mode = #tpu.pipeline_mode<synchronous>, transform_indices = @transform_9, window_bounds = array<i64: 4, 32>}, {pipeline_mode = #tpu.pipeline_mode<synchronous>, transform_indices = @transform_10, window_bounds = array<i64: 4, 128>}]} {
    %c0_i32 = arith.constant 0 : i32
    %0 = arith.cmpi eq, %arg0, %c0_i32 : i32
    %1 = arith.extui %0 : i1 to i32
    %c0_i32_0 = arith.constant 0 : i32
    %2 = arith.cmpi ne, %1, %c0_i32_0 : i32
    scf.if %2 {
      %cst_105 = arith.constant 0.000000e+00 : f32
      %215 = vector.broadcast %cst_105 : f32 to vector<4x32xf32>
      %c0_106 = arith.constant 0 : index
      %c0_107 = arith.constant 0 : index
      %216 = vector.load %arg12[%c0_106, %c0_107] : memref<4x32xf32, #tpu.memory_space<vmem>>, vector<4x32xf32>
      tpu.vector_store %arg12[%c0_106, %c0_107], %215 {strides = array<i32>} : memref<4x32xf32, #tpu.memory_space<vmem>>, vector<4x32xf32>,
      %cst_108 = arith.constant 0.000000e+00 : f32
      %217 = vector.broadcast %cst_108 : f32 to vector<4x32xf32>
      %c0_109 = arith.constant 0 : index
      %c0_110 = arith.constant 0 : index
      %218 = vector.load %arg13[%c0_109, %c0_110] : memref<4x32xf32, #tpu.memory_space<vmem>>, vector<4x32xf32>
      tpu.vector_store %arg13[%c0_109, %c0_110], %217 {strides = array<i32>} : memref<4x32xf32, #tpu.memory_space<vmem>>, vector<4x32xf32>,
      %cst_111 = arith.constant 0.000000e+00 : f32
      %219 = vector.broadcast %cst_111 : f32 to vector<4x32xf32>
      %c0_112 = arith.constant 0 : index
      %c0_113 = arith.constant 0 : index
      %220 = vector.load %arg14[%c0_112, %c0_113] : memref<4x32xf32, #tpu.memory_space<vmem>>, vector<4x32xf32>
      tpu.vector_store %arg14[%c0_112, %c0_113], %219 {strides = array<i32>} : memref<4x32xf32, #tpu.memory_space<vmem>>, vector<4x32xf32>,
      %cst_114 = arith.constant 0.000000e+00 : f32
      %221 = vector.broadcast %cst_114 : f32 to vector<4x128xf32>
      %c0_115 = arith.constant 0 : index
      %c0_116 = arith.constant 0 : index
      %222 = vector.load %arg15[%c0_115, %c0_116] : memref<4x128xf32, #tpu.memory_space<vmem>>, vector<4x128xf32>
      tpu.vector_store %arg15[%c0_115, %c0_116], %221 {strides = array<i32>} : memref<4x128xf32, #tpu.memory_space<vmem>>, vector<4x128xf32>,
    } else {
    }
    %c0 = arith.constant 0 : index
    %c0_1 = arith.constant 0 : index
    %3 = vector.load %arg1[%c0, %c0_1] : memref<32x16xf32, #tpu.memory_space<vmem>>, vector<32x16xf32>
    %c0_2 = arith.constant 0 : index
    %c0_3 = arith.constant 0 : index
    %4 = vector.load %arg2[%c0_2, %c0_3] : memref<16x128xf32, #tpu.memory_space<vmem>>, vector<16x128xf32>
    %cst = arith.constant dense<0.000000e+00> : vector<32x128xf32>
    %5 = tpu.matmul %3, %4, %cst {dimension_numbers = #tpu.dot_dimension_numbers<[1], [0], [0], [1], [0, 0, 1, 1], [], []>} : vector<32x16xf32>, vector<16x128xf32>, vector<32x128xf32> -> vector<32x128xf32>
    %c0_4 = arith.constant 0 : index
    %c0_5 = arith.constant 0 : index
    %6 = vector.load %arg3[%c0_4, %c0_5] : memref<32x128xf32, #tpu.memory_space<vmem>>, vector<32x128xf32>
    %7 = tpu.iota {dimensions = array<i32: 1>} : vector<4x128xi32>
    %c96_i32 = arith.constant 96 : i32
    %8 = vector.broadcast %c96_i32 : i32 to vector<4x128xi32>
    %9 = arith.cmpi slt, %7, %8 : vector<4x128xi32>
    %10 = arith.extui %9 : vector<4x128xi1> to vector<4x128xi32>
    %11 = arith.sitofp %10 : vector<4x128xi32> to vector<4x128xf32>
    %c0_6 = arith.constant 0 : index
    %c0_7 = arith.constant 0 : index
    %12 = vector.load %arg12[%c0_6, %c0_7] : memref<4x32xf32, #tpu.memory_space<vmem>>, vector<4x32xf32>
    %c0_8 = arith.constant 0 : index
    %c0_9 = arith.constant 0 : index
    %13 = vector.load %arg13[%c0_8, %c0_9] : memref<4x32xf32, #tpu.memory_space<vmem>>, vector<4x32xf32>
    %c0_10 = arith.constant 0 : index
    %c0_11 = arith.constant 0 : index
    %14 = vector.load %arg14[%c0_10, %c0_11] : memref<4x32xf32, #tpu.memory_space<vmem>>, vector<4x32xf32>
    %c0_12 = arith.constant 0 : index
    %c0_13 = arith.constant 0 : index
    %15 = vector.load %arg15[%c0_12, %c0_13] : memref<4x128xf32, #tpu.memory_space<vmem>>, vector<4x128xf32>
    %16 = vector.extract_strided_slice %5 {offsets = [0, 0], sizes = [4, 128], strides = [1, 1]} : vector<32x128xf32> to vector<4x128xf32>
    %cst_14 = arith.constant dense<0.000000e+00> : vector<4x128xf32>
    %17 = tpu.matmul %12, %6, %cst_14 {dimension_numbers = #tpu.dot_dimension_numbers<[1], [0], [0], [1], [0, 0, 1, 1], [], []>} : vector<4x32xf32>, vector<32x128xf32>, vector<4x128xf32> -> vector<4x128xf32>
    %18 = arith.addf %16, %17 : vector<4x128xf32>
    %19 = arith.addf %15, %18 : vector<4x128xf32>
    %20 = vector.extract_strided_slice %19 {offsets = [0, 0], sizes = [4, 32], strides = [1, 1]} : vector<4x128xf32> to vector<4x32xf32>
    %c96_i32_15 = arith.constant 96 : i32
    %21 = tpu.dynamic_rotate %19 by %c96_i32_15 dim 1 : vector<4x128xf32>, i32 -> vector<4x128xf32>
    %22 = arith.mulf %21, %11 : vector<4x128xf32>
    %cst_16 = arith.constant 0.951229453 : f32
    %23 = vector.broadcast %cst_16 : f32 to vector<4x32xf32>
    %24 = arith.mulf %23, %13 : vector<4x32xf32>
    %25 = arith.addf %24, %20 : vector<4x32xf32>
    %cst_17 = arith.constant 1.000000e+00 : f32
    %26 = vector.broadcast %cst_17 : f32 to vector<4x32xf32>
    %27 = arith.mulf %12, %26 : vector<4x32xf32>
    %28 = arith.subf %25, %27 : vector<4x32xf32>
    %cst_18 = arith.constant 1.000000e+00 : f32
    %29 = vector.broadcast %cst_18 : f32 to vector<4x32xf32>
    %30 = arith.cmpf ogt, %28, %29 : vector<4x32xf32>
    %31 = arith.extui %30 : vector<4x32xi1> to vector<4x32xi32>
    %32 = arith.sitofp %31 : vector<4x32xi32> to vector<4x32xf32>
    %cst_19 = arith.constant 0.951229453 : f32
    %33 = vector.broadcast %cst_19 : f32 to vector<4x32xf32>
    %34 = arith.mulf %33, %14 : vector<4x32xf32>
    %cst_20 = arith.constant 0.0487705767 : f32
    %35 = vector.broadcast %cst_20 : f32 to vector<4x32xf32>
    %36 = arith.mulf %35, %32 : vector<4x32xf32>
    %37 = arith.addf %34, %36 : vector<4x32xf32>
    %c0_21 = arith.constant 0 : index
    %c0_22 = arith.constant 0 : index
    %38 = vector.load %arg7[%c0_21, %c0_22] : memref<4x256xf32, #tpu.memory_space<vmem>>, vector<4x32xf32>
    tpu.vector_store %arg7[%c0_21, %c0_22], %32 {strides = array<i32>} : memref<4x256xf32, #tpu.memory_space<vmem>>, vector<4x32xf32>,
    %c0_23 = arith.constant 0 : index
    %c0_24 = arith.constant 0 : index
    %39 = vector.load %arg8[%c0_23, %c0_24] : memref<4x256xf32, #tpu.memory_space<vmem>>, vector<4x32xf32>
    tpu.vector_store %arg8[%c0_23, %c0_24], %37 {strides = array<i32>} : memref<4x256xf32, #tpu.memory_space<vmem>>, vector<4x32xf32>,
    %40 = vector.extract_strided_slice %5 {offsets = [4, 0], sizes = [4, 128], strides = [1, 1]} : vector<32x128xf32> to vector<4x128xf32>
    %cst_25 = arith.constant dense<0.000000e+00> : vector<4x128xf32>
    %41 = tpu.matmul %32, %6, %cst_25 {dimension_numbers = #tpu.dot_dimension_numbers<[1], [0], [0], [1], [0, 0, 1, 1], [], []>} : vector<4x32xf32>, vector<32x128xf32>, vector<4x128xf32> -> vector<4x128xf32>
    %42 = arith.addf %40, %41 : vector<4x128xf32>
    %43 = arith.addf %22, %42 : vector<4x128xf32>
    %44 = vector.extract_strided_slice %43 {offsets = [0, 0], sizes = [4, 32], strides = [1, 1]} : vector<4x128xf32> to vector<4x32xf32>
    %c96_i32_26 = arith.constant 96 : i32
    %45 = tpu.dynamic_rotate %43 by %c96_i32_26 dim 1 : vector<4x128xf32>, i32 -> vector<4x128xf32>
    %46 = arith.mulf %45, %11 : vector<4x128xf32>
    %cst_27 = arith.constant 0.951229453 : f32
    %47 = vector.broadcast %cst_27 : f32 to vector<4x32xf32>
    %48 = arith.mulf %47, %28 : vector<4x32xf32>
    %49 = arith.addf %48, %44 : vector<4x32xf32>
    %cst_28 = arith.constant 1.000000e+00 : f32
    %50 = vector.broadcast %cst_28 : f32 to vector<4x32xf32>
    %51 = arith.mulf %32, %50 : vector<4x32xf32>
    %52 = arith.subf %49, %51 : vector<4x32xf32>
    %cst_29 = arith.constant 1.000000e+00 : f32
    %53 = vector.broadcast %cst_29 : f32 to vector<4x32xf32>
    %54 = arith.cmpf ogt, %52, %53 : vector<4x32xf32>
    %55 = arith.extui %54 : vector<4x32xi1> to vector<4x32xi32>
    %56 = arith.sitofp %55 : vector<4x32xi32> to vector<4x32xf32>
    %cst_30 = arith.constant 0.951229453 : f32
    %57 = vector.broadcast %cst_30 : f32 to vector<4x32xf32>
    %58 = arith.mulf %57, %37 : vector<4x32xf32>
    %cst_31 = arith.constant 0.0487705767 : f32
    %59 = vector.broadcast %cst_31 : f32 to vector<4x32xf32>
    %60 = arith.mulf %59, %56 : vector<4x32xf32>
    %61 = arith.addf %58, %60 : vector<4x32xf32>
    %c0_32 = arith.constant 0 : index
    %c32 = arith.constant 32 : index
    %62 = vector.load %arg7[%c0_32, %c32] : memref<4x256xf32, #tpu.memory_space<vmem>>, vector<4x32xf32>
    tpu.vector_store %arg7[%c0_32, %c32], %56 {strides = array<i32>} : memref<4x256xf32, #tpu.memory_space<vmem>>, vector<4x32xf32>,
    %c0_33 = arith.constant 0 : index
    %c32_34 = arith.constant 32 : index
    %63 = vector.load %arg8[%c0_33, %c32_34] : memref<4x256xf32, #tpu.memory_space<vmem>>, vector<4x32xf32>
    tpu.vector_store %arg8[%c0_33, %c32_34], %61 {strides = array<i32>} : memref<4x256xf32, #tpu.memory_space<vmem>>, vector<4x32xf32>,
    %64 = vector.extract_strided_slice %5 {offsets = [8, 0], sizes = [4, 128], strides = [1, 1]} : vector<32x128xf32> to vector<4x128xf32>
    %cst_35 = arith.constant dense<0.000000e+00> : vector<4x128xf32>
    %65 = tpu.matmul %56, %6, %cst_35 {dimension_numbers = #tpu.dot_dimension_numbers<[1], [0], [0], [1], [0, 0, 1, 1], [], []>} : vector<4x32xf32>, vector<32x128xf32>, vector<4x128xf32> -> vector<4x128xf32>
    %66 = arith.addf %64, %65 : vector<4x128xf32>
    %67 = arith.addf %46, %66 : vector<4x128xf32>
    %68 = vector.extract_strided_slice %67 {offsets = [0, 0], sizes = [4, 32], strides = [1, 1]} : vector<4x128xf32> to vector<4x32xf32>
    %c96_i32_36 = arith.constant 96 : i32
    %69 = tpu.dynamic_rotate %67 by %c96_i32_36 dim 1 : vector<4x128xf32>, i32 -> vector<4x128xf32>
    %70 = arith.mulf %69, %11 : vector<4x128xf32>
    %cst_37 = arith.constant 0.951229453 : f32
    %71 = vector.broadcast %cst_37 : f32 to vector<4x32xf32>
    %72 = arith.mulf %71, %52 : vector<4x32xf32>
    %73 = arith.addf %72, %68 : vector<4x32xf32>
    %cst_38 = arith.constant 1.000000e+00 : f32
    %74 = vector.broadcast %cst_38 : f32 to vector<4x32xf32>
    %75 = arith.mulf %56, %74 : vector<4x32xf32>
    %76 = arith.subf %73, %75 : vector<4x32xf32>
    %cst_39 = arith.constant 1.000000e+00 : f32
    %77 = vector.broadcast %cst_39 : f32 to vector<4x32xf32>
    %78 = arith.cmpf ogt, %76, %77 : vector<4x32xf32>
    %79 = arith.extui %78 : vector<4x32xi1> to vector<4x32xi32>
    %80 = arith.sitofp %79 : vector<4x32xi32> to vector<4x32xf32>
    %cst_40 = arith.constant 0.951229453 : f32
    %81 = vector.broadcast %cst_40 : f32 to vector<4x32xf32>
    %82 = arith.mulf %81, %61 : vector<4x32xf32>
    %cst_41 = arith.constant 0.0487705767 : f32
    %83 = vector.broadcast %cst_41 : f32 to vector<4x32xf32>
    %84 = arith.mulf %83, %80 : vector<4x32xf32>
    %85 = arith.addf %82, %84 : vector<4x32xf32>
    %c0_42 = arith.constant 0 : index
    %c64 = arith.constant 64 : index
    %86 = vector.load %arg7[%c0_42, %c64] : memref<4x256xf32, #tpu.memory_space<vmem>>, vector<4x32xf32>
    tpu.vector_store %arg7[%c0_42, %c64], %80 {strides = array<i32>} : memref<4x256xf32, #tpu.memory_space<vmem>>, vector<4x32xf32>,
    %c0_43 = arith.constant 0 : index
    %c64_44 = arith.constant 64 : index
    %87 = vector.load %arg8[%c0_43, %c64_44] : memref<4x256xf32, #tpu.memory_space<vmem>>, vector<4x32xf32>
    tpu.vector_store %arg8[%c0_43, %c64_44], %85 {strides = array<i32>} : memref<4x256xf32, #tpu.memory_space<vmem>>, vector<4x32xf32>,
    %88 = vector.extract_strided_slice %5 {offsets = [12, 0], sizes = [4, 128], strides = [1, 1]} : vector<32x128xf32> to vector<4x128xf32>
    %cst_45 = arith.constant dense<0.000000e+00> : vector<4x128xf32>
    %89 = tpu.matmul %80, %6, %cst_45 {dimension_numbers = #tpu.dot_dimension_numbers<[1], [0], [0], [1], [0, 0, 1, 1], [], []>} : vector<4x32xf32>, vector<32x128xf32>, vector<4x128xf32> -> vector<4x128xf32>
    %90 = arith.addf %88, %89 : vector<4x128xf32>
    %91 = arith.addf %70, %90 : vector<4x128xf32>
    %92 = vector.extract_strided_slice %91 {offsets = [0, 0], sizes = [4, 32], strides = [1, 1]} : vector<4x128xf32> to vector<4x32xf32>
    %c96_i32_46 = arith.constant 96 : i32
    %93 = tpu.dynamic_rotate %91 by %c96_i32_46 dim 1 : vector<4x128xf32>, i32 -> vector<4x128xf32>
    %94 = arith.mulf %93, %11 : vector<4x128xf32>
    %cst_47 = arith.constant 0.951229453 : f32
    %95 = vector.broadcast %cst_47 : f32 to vector<4x32xf32>
    %96 = arith.mulf %95, %76 : vector<4x32xf32>
    %97 = arith.addf %96, %92 : vector<4x32xf32>
    %cst_48 = arith.constant 1.000000e+00 : f32
    %98 = vector.broadcast %cst_48 : f32 to vector<4x32xf32>
    %99 = arith.mulf %80, %98 : vector<4x32xf32>
    %100 = arith.subf %97, %99 : vector<4x32xf32>
    %cst_49 = arith.constant 1.000000e+00 : f32
    %101 = vector.broadcast %cst_49 : f32 to vector<4x32xf32>
    %102 = arith.cmpf ogt, %100, %101 : vector<4x32xf32>
    %103 = arith.extui %102 : vector<4x32xi1> to vector<4x32xi32>
    %104 = arith.sitofp %103 : vector<4x32xi32> to vector<4x32xf32>
    %cst_50 = arith.constant 0.951229453 : f32
    %105 = vector.broadcast %cst_50 : f32 to vector<4x32xf32>
    %106 = arith.mulf %105, %85 : vector<4x32xf32>
    %cst_51 = arith.constant 0.0487705767 : f32
    %107 = vector.broadcast %cst_51 : f32 to vector<4x32xf32>
    %108 = arith.mulf %107, %104 : vector<4x32xf32>
    %109 = arith.addf %106, %108 : vector<4x32xf32>
    %c0_52 = arith.constant 0 : index
    %c96 = arith.constant 96 : index
    %110 = vector.load %arg7[%c0_52, %c96] : memref<4x256xf32, #tpu.memory_space<vmem>>, vector<4x32xf32>
    tpu.vector_store %arg7[%c0_52, %c96], %104 {strides = array<i32>} : memref<4x256xf32, #tpu.memory_space<vmem>>, vector<4x32xf32>,
    %c0_53 = arith.constant 0 : index
    %c96_54 = arith.constant 96 : index
    %111 = vector.load %arg8[%c0_53, %c96_54] : memref<4x256xf32, #tpu.memory_space<vmem>>, vector<4x32xf32>
    tpu.vector_store %arg8[%c0_53, %c96_54], %109 {strides = array<i32>} : memref<4x256xf32, #tpu.memory_space<vmem>>, vector<4x32xf32>,
    %112 = vector.extract_strided_slice %5 {offsets = [16, 0], sizes = [4, 128], strides = [1, 1]} : vector<32x128xf32> to vector<4x128xf32>
    %cst_55 = arith.constant dense<0.000000e+00> : vector<4x128xf32>
    %113 = tpu.matmul %104, %6, %cst_55 {dimension_numbers = #tpu.dot_dimension_numbers<[1], [0], [0], [1], [0, 0, 1, 1], [], []>} : vector<4x32xf32>, vector<32x128xf32>, vector<4x128xf32> -> vector<4x128xf32>
    %114 = arith.addf %112, %113 : vector<4x128xf32>
    %115 = arith.addf %94, %114 : vector<4x128xf32>
    %116 = vector.extract_strided_slice %115 {offsets = [0, 0], sizes = [4, 32], strides = [1, 1]} : vector<4x128xf32> to vector<4x32xf32>
    %c96_i32_56 = arith.constant 96 : i32
    %117 = tpu.dynamic_rotate %115 by %c96_i32_56 dim 1 : vector<4x128xf32>, i32 -> vector<4x128xf32>
    %118 = arith.mulf %117, %11 : vector<4x128xf32>
    %cst_57 = arith.constant 0.951229453 : f32
    %119 = vector.broadcast %cst_57 : f32 to vector<4x32xf32>
    %120 = arith.mulf %119, %100 : vector<4x32xf32>
    %121 = arith.addf %120, %116 : vector<4x32xf32>
    %cst_58 = arith.constant 1.000000e+00 : f32
    %122 = vector.broadcast %cst_58 : f32 to vector<4x32xf32>
    %123 = arith.mulf %104, %122 : vector<4x32xf32>
    %124 = arith.subf %121, %123 : vector<4x32xf32>
    %cst_59 = arith.constant 1.000000e+00 : f32
    %125 = vector.broadcast %cst_59 : f32 to vector<4x32xf32>
    %126 = arith.cmpf ogt, %124, %125 : vector<4x32xf32>
    %127 = arith.extui %126 : vector<4x32xi1> to vector<4x32xi32>
    %128 = arith.sitofp %127 : vector<4x32xi32> to vector<4x32xf32>
    %cst_60 = arith.constant 0.951229453 : f32
    %129 = vector.broadcast %cst_60 : f32 to vector<4x32xf32>
    %130 = arith.mulf %129, %109 : vector<4x32xf32>
    %cst_61 = arith.constant 0.0487705767 : f32
    %131 = vector.broadcast %cst_61 : f32 to vector<4x32xf32>
    %132 = arith.mulf %131, %128 : vector<4x32xf32>
    %133 = arith.addf %130, %132 : vector<4x32xf32>
    %c0_62 = arith.constant 0 : index
    %c128 = arith.constant 128 : index
    %134 = vector.load %arg7[%c0_62, %c128] : memref<4x256xf32, #tpu.memory_space<vmem>>, vector<4x32xf32>
    tpu.vector_store %arg7[%c0_62, %c128], %128 {strides = array<i32>} : memref<4x256xf32, #tpu.memory_space<vmem>>, vector<4x32xf32>,
    %c0_63 = arith.constant 0 : index
    %c128_64 = arith.constant 128 : index
    %135 = vector.load %arg8[%c0_63, %c128_64] : memref<4x256xf32, #tpu.memory_space<vmem>>, vector<4x32xf32>
    tpu.vector_store %arg8[%c0_63, %c128_64], %133 {strides = array<i32>} : memref<4x256xf32, #tpu.memory_space<vmem>>, vector<4x32xf32>,
    %136 = vector.extract_strided_slice %5 {offsets = [20, 0], sizes = [4, 128], strides = [1, 1]} : vector<32x128xf32> to vector<4x128xf32>
    %cst_65 = arith.constant dense<0.000000e+00> : vector<4x128xf32>
    %137 = tpu.matmul %128, %6, %cst_65 {dimension_numbers = #tpu.dot_dimension_numbers<[1], [0], [0], [1], [0, 0, 1, 1], [], []>} : vector<4x32xf32>, vector<32x128xf32>, vector<4x128xf32> -> vector<4x128xf32>
    %138 = arith.addf %136, %137 : vector<4x128xf32>
    %139 = arith.addf %118, %138 : vector<4x128xf32>
    %140 = vector.extract_strided_slice %139 {offsets = [0, 0], sizes = [4, 32], strides = [1, 1]} : vector<4x128xf32> to vector<4x32xf32>
    %c96_i32_66 = arith.constant 96 : i32
    %141 = tpu.dynamic_rotate %139 by %c96_i32_66 dim 1 : vector<4x128xf32>, i32 -> vector<4x128xf32>
    %142 = arith.mulf %141, %11 : vector<4x128xf32>
    %cst_67 = arith.constant 0.951229453 : f32
    %143 = vector.broadcast %cst_67 : f32 to vector<4x32xf32>
    %144 = arith.mulf %143, %124 : vector<4x32xf32>
    %145 = arith.addf %144, %140 : vector<4x32xf32>
    %cst_68 = arith.constant 1.000000e+00 : f32
    %146 = vector.broadcast %cst_68 : f32 to vector<4x32xf32>
    %147 = arith.mulf %128, %146 : vector<4x32xf32>
    %148 = arith.subf %145, %147 : vector<4x32xf32>
    %cst_69 = arith.constant 1.000000e+00 : f32
    %149 = vector.broadcast %cst_69 : f32 to vector<4x32xf32>
    %150 = arith.cmpf ogt, %148, %149 : vector<4x32xf32>
    %151 = arith.extui %150 : vector<4x32xi1> to vector<4x32xi32>
    %152 = arith.sitofp %151 : vector<4x32xi32> to vector<4x32xf32>
    %cst_70 = arith.constant 0.951229453 : f32
    %153 = vector.broadcast %cst_70 : f32 to vector<4x32xf32>
    %154 = arith.mulf %153, %133 : vector<4x32xf32>
    %cst_71 = arith.constant 0.0487705767 : f32
    %155 = vector.broadcast %cst_71 : f32 to vector<4x32xf32>
    %156 = arith.mulf %155, %152 : vector<4x32xf32>
    %157 = arith.addf %154, %156 : vector<4x32xf32>
    %c0_72 = arith.constant 0 : index
    %c160 = arith.constant 160 : index
    %158 = vector.load %arg7[%c0_72, %c160] : memref<4x256xf32, #tpu.memory_space<vmem>>, vector<4x32xf32>
    tpu.vector_store %arg7[%c0_72, %c160], %152 {strides = array<i32>} : memref<4x256xf32, #tpu.memory_space<vmem>>, vector<4x32xf32>,
    %c0_73 = arith.constant 0 : index
    %c160_74 = arith.constant 160 : index
    %159 = vector.load %arg8[%c0_73, %c160_74] : memref<4x256xf32, #tpu.memory_space<vmem>>, vector<4x32xf32>
    tpu.vector_store %arg8[%c0_73, %c160_74], %157 {strides = array<i32>} : memref<4x256xf32, #tpu.memory_space<vmem>>, vector<4x32xf32>,
    %160 = vector.extract_strided_slice %5 {offsets = [24, 0], sizes = [4, 128], strides = [1, 1]} : vector<32x128xf32> to vector<4x128xf32>
    %cst_75 = arith.constant dense<0.000000e+00> : vector<4x128xf32>
    %161 = tpu.matmul %152, %6, %cst_75 {dimension_numbers = #tpu.dot_dimension_numbers<[1], [0], [0], [1], [0, 0, 1, 1], [], []>} : vector<4x32xf32>, vector<32x128xf32>, vector<4x128xf32> -> vector<4x128xf32>
    %162 = arith.addf %160, %161 : vector<4x128xf32>
    %163 = arith.addf %142, %162 : vector<4x128xf32>
    %164 = vector.extract_strided_slice %163 {offsets = [0, 0], sizes = [4, 32], strides = [1, 1]} : vector<4x128xf32> to vector<4x32xf32>
    %c96_i32_76 = arith.constant 96 : i32
    %165 = tpu.dynamic_rotate %163 by %c96_i32_76 dim 1 : vector<4x128xf32>, i32 -> vector<4x128xf32>
    %166 = arith.mulf %165, %11 : vector<4x128xf32>
    %cst_77 = arith.constant 0.951229453 : f32
    %167 = vector.broadcast %cst_77 : f32 to vector<4x32xf32>
    %168 = arith.mulf %167, %148 : vector<4x32xf32>
    %169 = arith.addf %168, %164 : vector<4x32xf32>
    %cst_78 = arith.constant 1.000000e+00 : f32
    %170 = vector.broadcast %cst_78 : f32 to vector<4x32xf32>
    %171 = arith.mulf %152, %170 : vector<4x32xf32>
    %172 = arith.subf %169, %171 : vector<4x32xf32>
    %cst_79 = arith.constant 1.000000e+00 : f32
    %173 = vector.broadcast %cst_79 : f32 to vector<4x32xf32>
    %174 = arith.cmpf ogt, %172, %173 : vector<4x32xf32>
    %175 = arith.extui %174 : vector<4x32xi1> to vector<4x32xi32>
    %176 = arith.sitofp %175 : vector<4x32xi32> to vector<4x32xf32>
    %cst_80 = arith.constant 0.951229453 : f32
    %177 = vector.broadcast %cst_80 : f32 to vector<4x32xf32>
    %178 = arith.mulf %177, %157 : vector<4x32xf32>
    %cst_81 = arith.constant 0.0487705767 : f32
    %179 = vector.broadcast %cst_81 : f32 to vector<4x32xf32>
    %180 = arith.mulf %179, %176 : vector<4x32xf32>
    %181 = arith.addf %178, %180 : vector<4x32xf32>
    %c0_82 = arith.constant 0 : index
    %c192 = arith.constant 192 : index
    %182 = vector.load %arg7[%c0_82, %c192] : memref<4x256xf32, #tpu.memory_space<vmem>>, vector<4x32xf32>
    tpu.vector_store %arg7[%c0_82, %c192], %176 {strides = array<i32>} : memref<4x256xf32, #tpu.memory_space<vmem>>, vector<4x32xf32>,
    %c0_83 = arith.constant 0 : index
    %c192_84 = arith.constant 192 : index
    %183 = vector.load %arg8[%c0_83, %c192_84] : memref<4x256xf32, #tpu.memory_space<vmem>>, vector<4x32xf32>
    tpu.vector_store %arg8[%c0_83, %c192_84], %181 {strides = array<i32>} : memref<4x256xf32, #tpu.memory_space<vmem>>, vector<4x32xf32>,
    %184 = vector.extract_strided_slice %5 {offsets = [28, 0], sizes = [4, 128], strides = [1, 1]} : vector<32x128xf32> to vector<4x128xf32>
    %cst_85 = arith.constant dense<0.000000e+00> : vector<4x128xf32>
    %185 = tpu.matmul %176, %6, %cst_85 {dimension_numbers = #tpu.dot_dimension_numbers<[1], [0], [0], [1], [0, 0, 1, 1], [], []>} : vector<4x32xf32>, vector<32x128xf32>, vector<4x128xf32> -> vector<4x128xf32>
    %186 = arith.addf %184, %185 : vector<4x128xf32>
    %187 = arith.addf %166, %186 : vector<4x128xf32>
    %188 = vector.extract_strided_slice %187 {offsets = [0, 0], sizes = [4, 32], strides = [1, 1]} : vector<4x128xf32> to vector<4x32xf32>
    %c96_i32_86 = arith.constant 96 : i32
    %189 = tpu.dynamic_rotate %187 by %c96_i32_86 dim 1 : vector<4x128xf32>, i32 -> vector<4x128xf32>
    %190 = arith.mulf %189, %11 : vector<4x128xf32>
    %cst_87 = arith.constant 0.951229453 : f32
    %191 = vector.broadcast %cst_87 : f32 to vector<4x32xf32>
    %192 = arith.mulf %191, %172 : vector<4x32xf32>
    %193 = arith.addf %192, %188 : vector<4x32xf32>
    %cst_88 = arith.constant 1.000000e+00 : f32
    %194 = vector.broadcast %cst_88 : f32 to vector<4x32xf32>
    %195 = arith.mulf %176, %194 : vector<4x32xf32>
    %196 = arith.subf %193, %195 : vector<4x32xf32>
    %cst_89 = arith.constant 1.000000e+00 : f32
    %197 = vector.broadcast %cst_89 : f32 to vector<4x32xf32>
    %198 = arith.cmpf ogt, %196, %197 : vector<4x32xf32>
    %199 = arith.extui %198 : vector<4x32xi1> to vector<4x32xi32>
    %200 = arith.sitofp %199 : vector<4x32xi32> to vector<4x32xf32>
    %cst_90 = arith.constant 0.951229453 : f32
    %201 = vector.broadcast %cst_90 : f32 to vector<4x32xf32>
    %202 = arith.mulf %201, %181 : vector<4x32xf32>
    %cst_91 = arith.constant 0.0487705767 : f32
    %203 = vector.broadcast %cst_91 : f32 to vector<4x32xf32>
    %204 = arith.mulf %203, %200 : vector<4x32xf32>
    %205 = arith.addf %202, %204 : vector<4x32xf32>
    %c0_92 = arith.constant 0 : index
    %c224 = arith.constant 224 : index
    %206 = vector.load %arg7[%c0_92, %c224] : memref<4x256xf32, #tpu.memory_space<vmem>>, vector<4x32xf32>
    tpu.vector_store %arg7[%c0_92, %c224], %200 {strides = array<i32>} : memref<4x256xf32, #tpu.memory_space<vmem>>, vector<4x32xf32>,
    %c0_93 = arith.constant 0 : index
    %c224_94 = arith.constant 224 : index
    %207 = vector.load %arg8[%c0_93, %c224_94] : memref<4x256xf32, #tpu.memory_space<vmem>>, vector<4x32xf32>
    tpu.vector_store %arg8[%c0_93, %c224_94], %205 {strides = array<i32>} : memref<4x256xf32, #tpu.memory_space<vmem>>, vector<4x32xf32>,
    %c0_95 = arith.constant 0 : index
    %c0_96 = arith.constant 0 : index
    %208 = vector.load %arg12[%c0_95, %c0_96] : memref<4x32xf32, #tpu.memory_space<vmem>>, vector<4x32xf32>
    tpu.vector_store %arg12[%c0_95, %c0_96], %200 {strides = array<i32>} : memref<4x32xf32, #tpu.memory_space<vmem>>, vector<4x32xf32>,
    %c0_97 = arith.constant 0 : index
    %c0_98 = arith.constant 0 : index
    %209 = vector.load %arg13[%c0_97, %c0_98] : memref<4x32xf32, #tpu.memory_space<vmem>>, vector<4x32xf32>
    tpu.vector_store %arg13[%c0_97, %c0_98], %196 {strides = array<i32>} : memref<4x32xf32, #tpu.memory_space<vmem>>, vector<4x32xf32>,
    %c0_99 = arith.constant 0 : index
    %c0_100 = arith.constant 0 : index
    %210 = vector.load %arg14[%c0_99, %c0_100] : memref<4x32xf32, #tpu.memory_space<vmem>>, vector<4x32xf32>
    tpu.vector_store %arg14[%c0_99, %c0_100], %205 {strides = array<i32>} : memref<4x32xf32, #tpu.memory_space<vmem>>, vector<4x32xf32>,
    %c0_101 = arith.constant 0 : index
    %c0_102 = arith.constant 0 : index
    %211 = vector.load %arg15[%c0_101, %c0_102] : memref<4x128xf32, #tpu.memory_space<vmem>>, vector<4x128xf32>
    tpu.vector_store %arg15[%c0_101, %c0_102], %190 {strides = array<i32>} : memref<4x128xf32, #tpu.memory_space<vmem>>, vector<4x128xf32>,
    %c0_i32_103 = arith.constant 0 : i32
    %212 = arith.cmpi eq, %arg0, %c0_i32_103 : i32
    %213 = arith.extui %212 : i1 to i32
    %c0_i32_104 = arith.constant 0 : i32
    %214 = arith.cmpi ne, %213, %c0_i32_104 : i32
    scf.if %214 {
      %c0_105 = arith.constant 0 : index
      %c0_106 = arith.constant 0 : index
      %215 = vector.load %arg4[%c0_105, %c0_106] : memref<32x8xf32, #tpu.memory_space<vmem>>, vector<32x8xf32>
      %cst_107 = arith.constant dense<0.000000e+00> : vector<4x8xf32>
      %216 = tpu.matmul %205, %215, %cst_107 {dimension_numbers = #tpu.dot_dimension_numbers<[1], [0], [0], [1], [0, 0, 1, 1], [], []>} : vector<4x32xf32>, vector<32x8xf32>, vector<4x8xf32> -> vector<4x8xf32>
      %c0_108 = arith.constant 0 : index
      %c0_109 = arith.constant 0 : index
      %217 = vector.load %arg5[%c0_108, %c0_109] : memref<1x8xf32, #tpu.memory_space<vmem>>, vector<1x8xf32>
      %218 = vector.shape_cast %217 : vector<1x8xf32> to vector<8xf32>
      %219 = vector.shape_cast %218 : vector<8xf32> to vector<1x8xf32>
      %220 = vector.broadcast %219 : vector<1x8xf32> to vector<4x8xf32>
      %221 = arith.addf %216, %220 : vector<4x8xf32>
      %c0_110 = arith.constant 0 : index
      %c0_111 = arith.constant 0 : index
      %222 = vector.load %arg6[%c0_110, %c0_111] : memref<4x8xf32, #tpu.memory_space<vmem>>, vector<4x8xf32>
      tpu.vector_store %arg6[%c0_110, %c0_111], %221 {strides = array<i32>} : memref<4x8xf32, #tpu.memory_space<vmem>>, vector<4x8xf32>,
      %c0_112 = arith.constant 0 : index
      %c0_113 = arith.constant 0 : index
      %223 = vector.load %arg9[%c0_112, %c0_113] : memref<4x32xf32, #tpu.memory_space<vmem>>, vector<4x32xf32>
      tpu.vector_store %arg9[%c0_112, %c0_113], %200 {strides = array<i32>} : memref<4x32xf32, #tpu.memory_space<vmem>>, vector<4x32xf32>,
      %c0_114 = arith.constant 0 : index
      %c0_115 = arith.constant 0 : index
      %224 = vector.load %arg10[%c0_114, %c0_115] : memref<4x32xf32, #tpu.memory_space<vmem>>, vector<4x32xf32>
      tpu.vector_store %arg10[%c0_114, %c0_115], %196 {strides = array<i32>} : memref<4x32xf32, #tpu.memory_space<vmem>>, vector<4x32xf32>,
      %c0_116 = arith.constant 0 : index
      %c0_117 = arith.constant 0 : index
      %225 = vector.load %arg11[%c0_116, %c0_117] : memref<4x128xf32, #tpu.memory_space<vmem>>, vector<4x128xf32>
      tpu.vector_store %arg11[%c0_116, %c0_117], %190 {strides = array<i32>} : memref<4x128xf32, #tpu.memory_space<vmem>>, vector<4x128xf32>,
    } else {
    }
    return
  }
  func.func @transform_0(%arg0: i32) -> (i32, i32) {
    %c0_i32 = arith.constant 0 : i32
    %c0_i32_0 = arith.constant 0 : i32
    return %arg0, %c0_i32 : i32, i32
  }
  func.func @transform_1(%arg0: i32) -> (i32, i32) {
    %c0_i32 = arith.constant 0 : i32
    %c0_i32_0 = arith.constant 0 : i32
    %c0_i32_1 = arith.constant 0 : i32
    return %c0_i32, %c0_i32_0 : i32, i32
  }
  func.func @transform_2(%arg0: i32) -> (i32, i32) {
    %c0_i32 = arith.constant 0 : i32
    %c0_i32_0 = arith.constant 0 : i32
    %c0_i32_1 = arith.constant 0 : i32
    return %c0_i32, %c0_i32_0 : i32, i32
  }
  func.func @transform_3(%arg0: i32) -> (i32, i32) {
    %c0_i32 = arith.constant 0 : i32
    %c0_i32_0 = arith.constant 0 : i32
    %c0_i32_1 = arith.constant 0 : i32
    return %c0_i32, %c0_i32_0 : i32, i32
  }
  func.func @transform_4(%arg0: i32) -> (i32, i32) {
    %c0_i32 = arith.constant 0 : i32
    %c0_i32_0 = arith.constant 0 : i32
    %c0_i32_1 = arith.constant 0 : i32
    return %c0_i32, %c0_i32_0 : i32, i32
  }
  func.func @transform_5(%arg0: i32) -> (i32, i32) {
    %c0_i32 = arith.constant 0 : i32
    %c0_i32_0 = arith.constant 0 : i32
    %c0_i32_1 = arith.constant 0 : i32
    return %c0_i32, %c0_i32_0 : i32, i32
  }
  func.func @transform_6(%arg0: i32) -> (i32, i32) {
    %c0_i32 = arith.constant 0 : i32
    %c0_i32_0 = arith.constant 0 : i32
    return %c0_i32, %arg0 : i32, i32
  }
  func.func @transform_7(%arg0: i32) -> (i32, i32) {
    %c0_i32 = arith.constant 0 : i32
    %c0_i32_0 = arith.constant 0 : i32
    return %c0_i32, %arg0 : i32, i32
  }
  func.func @transform_8(%arg0: i32) -> (i32, i32) {
    %c0_i32 = arith.constant 0 : i32
    %c0_i32_0 = arith.constant 0 : i32
    %c0_i32_1 = arith.constant 0 : i32
    return %c0_i32, %c0_i32_0 : i32, i32
  }
  func.func @transform_9(%arg0: i32) -> (i32, i32) {
    %c0_i32 = arith.constant 0 : i32
    %c0_i32_0 = arith.constant 0 : i32
    %c0_i32_1 = arith.constant 0 : i32
    return %c0_i32, %c0_i32_0 : i32, i32
  }
  func.func @transform_10(%arg0: i32) -> (i32, i32) {
    %c0_i32 = arith.constant 0 : i32
    %c0_i32_0 = arith.constant 0 : i32
    %c0_i32_1 = arith.constant 0 : i32
    return %c0_i32, %c0_i32_0 : i32, i32
  }
}

</mosaic_0001>

<llo_original>
// kernel: tpu_custom_call.1
$region0: #{tpu_custom_call.1}
  #allocation0 [shape = 'u32[]', space=smem, size = 0x4, offset = 0x4, fixed_abs, tag = 'smem constant byte address 0x4 - core index']
  #allocation1 [shape = 'u32[72,128]{1,0:T(1,128)}', space=vmem, size = 0x9000, scoped, tag = 'internal scratch']
  #allocation2 [shape = 'f32[4,32]{1,0:T(4,128)}', space=vmem, size = 0x800, scoped, tag = 'scratch operand']
  #allocation3 [shape = 'f32[4,32]{1,0:T(4,128)}', space=vmem, size = 0x800, scoped, tag = 'scratch operand']
  #allocation4 [shape = 'f32[4,32]{1,0:T(4,128)}', space=vmem, size = 0x800, scoped, tag = 'scratch operand']
  #allocation5 [shape = 'f32[4,128]{1,0:T(4,128)}', space=vmem, size = 0x800, scoped, tag = 'scratch operand']
  %s0 = inlined_call_operand.vmem [shape: f32[32,16], index: 0, kind: input, shape index: {}]
  %s1 = inlined_call_operand.vmem [shape: f32[16,128], index: 1, kind: input, shape index: {}]
  %s2 = inlined_call_operand.vmem [shape: f32[32,128], index: 2, kind: input, shape index: {}]
  %s3 = inlined_call_operand.vmem [shape: f32[32,8], index: 3, kind: input, shape index: {}]
  %s4 = inlined_call_operand.vmem [shape: f32[1,8], index: 4, kind: input, shape index: {}]
  %s5 = inlined_call_operand.hbm [shape: f32[4,8], index: 5, kind: output, shape index: {0}]
  %s6 = inlined_call_operand.hbm [shape: f32[4,256], index: 6, kind: output, shape index: {1}]
  %s7 = inlined_call_operand.hbm [shape: f32[4,256], index: 7, kind: output, shape index: {2}]
  %s8 = inlined_call_operand.hbm [shape: f32[4,32], index: 8, kind: output, shape index: {3}]
  %s9 = inlined_call_operand.hbm [shape: f32[4,32], index: 9, kind: output, shape index: {4}]
  %s10 = inlined_call_operand.hbm [shape: f32[4,128], index: 10, kind: output, shape index: {5}]
  %11 = xla_tuple %s5, %s6, %s7, %s8, %s9, %s10
  %s12 = sld [smem:[#allocation0]]
  $region78: #{tpu_custom_call.1} parent=0
    _
  %s14 = ssub.s32 1, %s12
  %s15 = scalar_select 0, %s14, %s12
  $region1: #{tpu_custom_call.1} parent=0
    #allocation6 [shape = 'u8[2048]{0}', space=vmem, size = 0x800, scoped, tag = 'output window, operand 0, single buffered']
    #allocation7 [shape = 's32[1]{0}', space=sflag, size = 0x4, scoped, tag = 'scoped memory for tpu_custom_call.1']
    #allocation8 [shape = 'u8[4096]{0}', space=vmem, size = 0x1000, scoped, tag = 'output window, operand 1, single buffered']
    #allocation9 [shape = 's32[1]{0}', space=sflag, size = 0x4, scoped, tag = 'scoped memory for tpu_custom_call.1']
    #allocation10 [shape = 'u8[4096]{0}', space=vmem, size = 0x1000, scoped, tag = 'output window, operand 2, single buffered']
    #allocation11 [shape = 'u8[2048]{0}', space=vmem, size = 0x800, scoped, tag = 'output window, operand 3, single buffered']
    #allocation12 [shape = 's32[1]{0}', space=sflag, size = 0x4, scoped, tag = 'scoped memory for tpu_custom_call.1']
    #allocation13 [shape = 'u8[2048]{0}', space=vmem, size = 0x800, scoped, tag = 'output window, operand 4, single buffered']
    #allocation14 [shape = 'u8[2048]{0}', space=vmem, size = 0x800, scoped, tag = 'output window, operand 5, single buffered']
    #allocation15 [shape = 's32[1]{0}', space=sflag, size = 0x4, scoped, tag = 'scoped memory for tpu_custom_call.1']
    %16 = vsyncpa [#allocation7], 0
    %17 = vsyncpa [#allocation9], 0
    %18 = vsyncpa [#allocation12], 0
    %19 = vsyncpa [#allocation15], 0
    // Predicated region
    $region2: #{tpu_custom_call.1} parent=1 // pred_check
      _
    $region3: #{tpu_custom_call.1} parent=1 // pred_check_branch
      %21 = sbr.rel (0) target = $region5
    $region4: #{tpu_custom_call.1} parent=1 // pred_region
      _
    $region5: #{tpu_custom_call.1} parent=1 // pred_fallthru
      _
    // Predicated region
    $region6: #{tpu_custom_call.1} parent=1 // pred_check
      _
    $region7: #{tpu_custom_call.1} parent=1 // pred_check_branch
      %23 = sbr.rel (0) target = $region9
    $region8: #{tpu_custom_call.1} parent=1 // pred_region
      _
    $region9: #{tpu_custom_call.1} parent=1 // pred_fallthru
      _
    // Predicated region
    $region10: #{tpu_custom_call.1} parent=1 // pred_check
      _
    $region11: #{tpu_custom_call.1} parent=1 // pred_check_branch
      %25 = sbr.rel (0) target = $region13
    $region12: #{tpu_custom_call.1} parent=1 // pred_region
      _
    $region13: #{tpu_custom_call.1} parent=1 // pred_fallthru
      _
    // Predicated region
    $region14: #{tpu_custom_call.1} parent=1 // pred_check
      _
    $region15: #{tpu_custom_call.1} parent=1 // pred_check_branch
      %27 = sbr.rel (0) target = $region17
    $region16: #{tpu_custom_call.1} parent=1 // pred_region
      _
    $region17: #{tpu_custom_call.1} parent=1 // pred_fallthru
      _
    // Predicated region
    $region18: #{tpu_custom_call.1} parent=1 // pred_check
      _
    $region19: #{tpu_custom_call.1} parent=1 // pred_check_branch
      %29 = sbr.rel (0) target = $region21
    $region20: #{tpu_custom_call.1} parent=1 // pred_region
      _
    $region21: #{tpu_custom_call.1} parent=1 // pred_fallthru
      _
    %p30 = scmp.eq.s32.totalorder 0, 0
    // Predicated region
    $region22: #{tpu_custom_call.1} parent=1 // pred_check
      %p31 = pneg %p30
    $region23: #{tpu_custom_call.1} parent=1 // pred_check_branch
      %33 = sbr.rel (%p31) target = $region25
    $region24: #{tpu_custom_call.1} parent=1 // pred_region
      %vm34 = vcmask 257024
      %35 = vst.msk [vmem:[#allocation2] sm:$0xf] %vm34, 0.0
      %36 = vst.msk [vmem:[#allocation3] sm:$0xf] %vm34, 0.0
      %37 = vst.msk [vmem:[#allocation4] sm:$0xf] %vm34, 0.0
      %38 = vst [vmem:[#allocation5] sm:$0xf] 0.0
    $region25: #{tpu_custom_call.1} parent=1 // pred_fallthru
      _
    %v39 = vld [vmem:[%s0] sm:$0xff]
    %v40 = vld [vmem:[%s0 + $0x8] sm:$0xff]
    %v41 = vld [vmem:[%s0 + $0x10] sm:$0xff]
    %v42 = vld [vmem:[%s0 + $0x18] sm:$0xff]
    %v43 = vld [vmem:[%s1] sm:$0xff]
    %v44 = vld [vmem:[%s1 + $0x8] sm:$0xff]
    %vm45 = vcmask 130048
    %v47 = vsel %vm45, %v39, 0
    %v50 = vsel %vm45, %v40, 0
    %v53 = vsel %vm45, %v41, 0
    %v56 = vsel %vm45, %v42, 0
    %58 = vmatpush.msra.mxu0 0.0
    %59 = vmatpush.msra.mxu0 0.0
    %60 = vmatpush.msra.mxu0 0.0
    %61 = vmatpush.msra.mxu0 0.0
    %62 = vmatpush.msra.mxu0 0.0
    %63 = vmatpush.msra.mxu0 0.0
    %64 = vmatpush.msra.mxu0 0.0
    %65 = vmatpush.msra.mxu0 0.0
    %66 = vmatpush.msra.mxu0 0.0
    %67 = vmatpush.msra.mxu0 0.0
    %68 = vmatpush.msra.mxu0 0.0
    %69 = vmatpush.msra.mxu0 0.0
    %70 = vmatpush.msra.mxu0 0.0
    %71 = vmatpush.msra.mxu0 0.0
    %72 = vmatpush.msra.mxu0 %v44
    %73 = vmatpush.msra.mxu0 %v43
    %74 = vmatmul.f32.gmra.mxu0 %v47
    %v75 = vpop.f32.mrf.mxu0
    %v76 = vadd.f32 0.0, %v75
    %77 = vmatmul.f32.gmra.mxu0 %v50
    %v78 = vpop.f32.mrf.mxu0
    %v79 = vadd.f32 0.0, %v78
    %80 = vmatmul.f32.gmra.mxu0 %v53
    %v81 = vpop.f32.mrf.mxu0
    %v82 = vadd.f32 0.0, %v81
    %83 = vmatmul.f32.gmra.mxu0 %v56
    %v84 = vpop.f32.mrf.mxu0
    %v85 = vadd.f32 0.0, %v84
    %86 = vdwg.mxu0
    %v87 = vld [vmem:[%s2] sm:$0xff]
    %v88 = vld [vmem:[%s2 + $0x8] sm:$0xff]
    %v89 = vld [vmem:[%s2 + $0x10] sm:$0xff]
    %v90 = vld [vmem:[%s2 + $0x18] sm:$0xff]
    %v91 = vlaneseq
    %v92 = vand.u32 %v91, 127
    %vm93 = vcmp.lt.s32.totalorder %v92, 96
    %v94 = vsel %vm93, 1, 0
    %v95 = vcvt.s32.f32 %v94
    %v96 = vld [vmem:[#allocation2] sm:$0xf]
    %v97 = vld [vmem:[#allocation3] sm:$0xf]
    %v98 = vld [vmem:[#allocation4] sm:$0xf]
    %v99 = vld [vmem:[#allocation5] sm:$0xf]
    %vm100 = vcmask 261120
    %v102 = vsel %vm100, %v96, 0
    %104 = vmatpush.msra.mxu0 0.0
    %105 = vmatpush.msra.mxu0 0.0
    %106 = vmatpush.msra.mxu0 0.0
    %107 = vmatpush.msra.mxu0 0.0
    %108 = vmatpush.msra.mxu0 0.0
    %109 = vmatpush.msra.mxu0 0.0
    %110 = vmatpush.msra.mxu0 0.0
    %111 = vmatpush.msra.mxu0 0.0
    %112 = vmatpush.msra.mxu0 0.0
    %113 = vmatpush.msra.mxu0 0.0
    %114 = vmatpush.msra.mxu0 0.0
    %115 = vmatpush.msra.mxu0 0.0
    %116 = vmatpush.msra.mxu0 %v90
    %117 = vmatpush.msra.mxu0 %v89
    %118 = vmatpush.msra.mxu0 %v88
    %119 = vmatpush.msra.mxu0 %v87
    %120 = vmatmul.f32.gmra.mxu0 %v102
    %v121 = vpop.f32.mrf.mxu0
    %v122 = vadd.f32 0.0, %v121
    %123 = vdwg.mxu0
    %v124 = vadd.f32 %v76, %v122
    %v125 = vadd.f32 %v99, %v124
    %126 = vrot.lane.b32.xlu0 %v125, 96
    %v127 = vpop.permute.xlu0 %126
    %v128 = vmul.f32 %v127, %v95
    %v129 = vmul.f32 %v97, 0.95122945
    %v130 = vadd.f32 %v129, %v125
    %v131 = vsub.f32 %v130, %v96
    %vm132 = vcmp.gt.f32.partialorder %v131, 1.0
    %v133 = vsel %vm132, 1, 0
    %v134 = vcvt.s32.f32 %v133
    %v135 = vmul.f32 %v98, 0.95122945
    %v136 = vmul.f32 %v134, 0.048770577
    %v137 = vadd.f32 %v135, %v136
    %vm138 = vcmask 257024
    %139 = vst.msk [vmem:[#allocation8] sm:$0xf] %vm138, %v134
    %140 = vst.msk [vmem:[#allocation10] sm:$0xf] %vm138, %v137
    %v142 = vsel %vm100, %v134, 0
    %144 = vmatpush.msra.mxu0 0.0
    %145 = vmatpush.msra.mxu0 0.0
    %146 = vmatpush.msra.mxu0 0.0
    %147 = vmatpush.msra.mxu0 0.0
    %148 = vmatpush.msra.mxu0 0.0
    %149 = vmatpush.msra.mxu0 0.0
    %150 = vmatpush.msra.mxu0 0.0
    %151 = vmatpush.msra.mxu0 0.0
    %152 = vmatpush.msra.mxu0 0.0
    %153 = vmatpush.msra.mxu0 0.0
    %154 = vmatpush.msra.mxu0 0.0
    %155 = vmatpush.msra.mxu0 0.0
    %156 = vmatpush.msra.mxu0 %v90
    %157 = vmatpush.msra.mxu0 %v89
    %158 = vmatpush.msra.mxu0 %v88
    %159 = vmatpush.msra.mxu0 %v87
    %160 = vmatmul.f32.gmra.mxu0 %v142
    %v161 = vpop.f32.mrf.mxu0
    %v162 = vadd.f32 0.0, %v161
    %163 = vdwg.mxu0
    %v165 = vrot.slane %v162, 4
    %v167 = vadd.f32 %v76, %v165
    %v169 = vrot.slane %v167, 4
    %v171 = vadd.f32 %v128, %v169
    %172 = vrot.lane.b32.xlu0 %v171, 96
    %v173 = vpop.permute.xlu0 %172
    %v174 = vmul.f32 %v173, %v95
    %v175 = vmul.f32 %v131, 0.95122945
    %v176 = vadd.f32 %v175, %v171
    %v177 = vsub.f32 %v176, %v134
    %vm178 = vcmp.gt.f32.partialorder %v177, 1.0
    %v179 = vsel %vm178, 1, 0
    %v180 = vcvt.s32.f32 %v179
    %v181 = vmul.f32 %v137, 0.95122945
    %v182 = vmul.f32 %v180, 0.048770577
    %v183 = vadd.f32 %v181, %v182
    %185 = vrot.lane.b32.xlu0 %v180, 32
    %v186 = vpop.permute.xlu0 %185
    %vm188 = vcmask 519424
    %189 = vst.msk [vmem:[#allocation8] sm:$0xf] %vm188, %v186
    %191 = vrot.lane.b32.xlu0 %v183, 32
    %v192 = vpop.permute.xlu0 %191
    %194 = vst.msk [vmem:[#allocation10] sm:$0xf] %vm188, %v192
    %v195 = vsel %vm100, %v180, 0
    %197 = vmatpush.msra.mxu0 0.0
    %198 = vmatpush.msra.mxu0 0.0
    %199 = vmatpush.msra.mxu0 0.0
    %200 = vmatpush.msra.mxu0 0.0
    %201 = vmatpush.msra.mxu0 0.0
    %202 = vmatpush.msra.mxu0 0.0
    %203 = vmatpush.msra.mxu0 0.0
    %204 = vmatpush.msra.mxu0 0.0
    %205 = vmatpush.msra.mxu0 0.0
    %206 = vmatpush.msra.mxu0 0.0
    %207 = vmatpush.msra.mxu0 0.0
    %208 = vmatpush.msra.mxu0 0.0
    %209 = vmatpush.msra.mxu0 %v90
    %210 = vmatpush.msra.mxu0 %v89
    %211 = vmatpush.msra.mxu0 %v88
    %212 = vmatpush.msra.mxu0 %v87
    %213 = vmatmul.f32.gmra.mxu0 %v195
    %v214 = vpop.f32.mrf.mxu0
    %v215 = vadd.f32 0.0, %v214
    %216 = vdwg.mxu0
    %v217 = vadd.f32 %v79, %v215
    %v218 = vadd.f32 %v174, %v217
    %219 = vrot.lane.b32.xlu0 %v218, 96
    %v220 = vpop.permute.xlu0 %219
    %v221 = vmul.f32 %v220, %v95
    %v222 = vmul.f32 %v177, 0.95122945
    %v223 = vadd.f32 %v222, %v218
    %v224 = vsub.f32 %v223, %v180
    %vm225 = vcmp.gt.f32.partialorder %v224, 1.0
    %v226 = vsel %vm225, 1, 0
    %v227 = vcvt.s32.f32 %v226
    %v228 = vmul.f32 %v183, 0.95122945
    %v229 = vmul.f32 %v227, 0.048770577
    %v230 = vadd.f32 %v228, %v229
    %232 = vrot.lane.b32.xlu0 %v227, 64
    %v233 = vpop.permute.xlu0 %232
    %vm235 = vcmask 781824
    %236 = vst.msk [vmem:[#allocation8] sm:$0xf] %vm235, %v233
    %238 = vrot.lane.b32.xlu0 %v230, 64
    %v239 = vpop.permute.xlu0 %238
    %241 = vst.msk [vmem:[#allocation10] sm:$0xf] %vm235, %v239
    %v242 = vsel %vm100, %v227, 0
    %244 = vmatpush.msra.mxu0 0.0
    %245 = vmatpush.msra.mxu0 0.0
    %246 = vmatpush.msra.mxu0 0.0
    %247 = vmatpush.msra.mxu0 0.0
    %248 = vmatpush.msra.mxu0 0.0
    %249 = vmatpush.msra.mxu0 0.0
    %250 = vmatpush.msra.mxu0 0.0
    %251 = vmatpush.msra.mxu0 0.0
    %252 = vmatpush.msra.mxu0 0.0
    %253 = vmatpush.msra.mxu0 0.0
    %254 = vmatpush.msra.mxu0 0.0
    %255 = vmatpush.msra.mxu0 0.0
    %256 = vmatpush.msra.mxu0 %v90
    %257 = vmatpush.msra.mxu0 %v89
    %258 = vmatpush.msra.mxu0 %v88
    %259 = vmatpush.msra.mxu0 %v87
    %260 = vmatmul.f32.gmra.mxu0 %v242
    %v261 = vpop.f32.mrf.mxu0
    %v262 = vadd.f32 0.0, %v261
    %263 = vdwg.mxu0
    %v265 = vrot.slane %v262, 4
    %v267 = vadd.f32 %v79, %v265
    %v269 = vrot.slane %v267, 4
    %v271 = vadd.f32 %v221, %v269
    %272 = vrot.lane.b32.xlu0 %v271, 96
    %v273 = vpop.permute.xlu0 %272
    %v274 = vmul.f32 %v273, %v95
    %v275 = vmul.f32 %v224, 0.95122945
    %v276 = vadd.f32 %v275, %v271
    %v277 = vsub.f32 %v276, %v227
    %vm278 = vcmp.gt.f32.partialorder %v277, 1.0
    %v279 = vsel %vm278, 1, 0
    %v280 = vcvt.s32.f32 %v279
    %v281 = vmul.f32 %v230, 0.95122945
    %v282 = vmul.f32 %v280, 0.048770577
    %v283 = vadd.f32 %v281, %v282
    %285 = vrot.lane.b32.xlu0 %v280, 96
    %v286 = vpop.permute.xlu0 %285
    %vm288 = vcmask 1044224
    %289 = vst.msk [vmem:[#allocation8] sm:$0xf] %vm288, %v286
    %291 = vrot.lane.b32.xlu0 %v283, 96
    %v292 = vpop.permute.xlu0 %291
    %294 = vst.msk [vmem:[#allocation10] sm:$0xf] %vm288, %v292
    %v295 = vsel %vm100, %v280, 0
    %297 = vmatpush.msra.mxu0 0.0
    %298 = vmatpush.msra.mxu0 0.0
    %299 = vmatpush.msra.mxu0 0.0
    %300 = vmatpush.msra.mxu0 0.0
    %301 = vmatpush.msra.mxu0 0.0
    %302 = vmatpush.msra.mxu0 0.0
    %303 = vmatpush.msra.mxu0 0.0
    %304 = vmatpush.msra.mxu0 0.0
    %305 = vmatpush.msra.mxu0 0.0
    %306 = vmatpush.msra.mxu0 0.0
    %307 = vmatpush.msra.mxu0 0.0
    %308 = vmatpush.msra.mxu0 0.0
    %309 = vmatpush.msra.mxu0 %v90
    %310 = vmatpush.msra.mxu0 %v89
    %311 = vmatpush.msra.mxu0 %v88
    %312 = vmatpush.msra.mxu0 %v87
    %313 = vmatmul.f32.gmra.mxu0 %v295
    %v314 = vpop.f32.mrf.mxu0
    %v315 = vadd.f32 0.0, %v314
    %316 = vdwg.mxu0
    %v317 = vadd.f32 %v82, %v315
    %v318 = vadd.f32 %v274, %v317
    %319 = vrot.lane.b32.xlu0 %v318, 96
    %v320 = vpop.permute.xlu0 %319
    %v321 = vmul.f32 %v320, %v95
    %v322 = vmul.f32 %v277, 0.95122945
    %v323 = vadd.f32 %v322, %v318
    %v324 = vsub.f32 %v323, %v280
    %vm325 = vcmp.gt.f32.partialorder %v324, 1.0
    %v326 = vsel %vm325, 1, 0
    %v327 = vcvt.s32.f32 %v326
    %v328 = vmul.f32 %v283, 0.95122945
    %v329 = vmul.f32 %v327, 0.048770577
    %v330 = vadd.f32 %v328, %v329
    %331 = vst.msk [vmem:[#allocation8 + $0x4] sm:$0xf] %vm138, %v327
    %332 = vst.msk [vmem:[#allocation10 + $0x4] sm:$0xf] %vm138, %v330
    %v334 = vsel %vm100, %v327, 0
    %336 = vmatpush.msra.mxu0 0.0
    %337 = vmatpush.msra.mxu0 0.0
    %338 = vmatpush.msra.mxu0 0.0
    %339 = vmatpush.msra.mxu0 0.0
    %340 = vmatpush.msra.mxu0 0.0
    %341 = vmatpush.msra.mxu0 0.0
    %342 = vmatpush.msra.mxu0 0.0
    %343 = vmatpush.msra.mxu0 0.0
    %344 = vmatpush.msra.mxu0 0.0
    %345 = vmatpush.msra.mxu0 0.0
    %346 = vmatpush.msra.mxu0 0.0
    %347 = vmatpush.msra.mxu0 0.0
    %348 = vmatpush.msra.mxu0 %v90
    %349 = vmatpush.msra.mxu0 %v89
    %350 = vmatpush.msra.mxu0 %v88
    %351 = vmatpush.msra.mxu0 %v87
    %352 = vmatmul.f32.gmra.mxu0 %v334
    %v353 = vpop.f32.mrf.mxu0
    %v354 = vadd.f32 0.0, %v353
    %355 = vdwg.mxu0
    %v357 = vrot.slane %v354, 4
    %v359 = vadd.f32 %v82, %v357
    %v361 = vrot.slane %v359, 4
    %v363 = vadd.f32 %v321, %v361
    %364 = vrot.lane.b32.xlu0 %v363, 96
    %v365 = vpop.permute.xlu0 %364
    %v366 = vmul.f32 %v365, %v95
    %v367 = vmul.f32 %v324, 0.95122945
    %v368 = vadd.f32 %v367, %v363
    %v369 = vsub.f32 %v368, %v327
    %vm370 = vcmp.gt.f32.partialorder %v369, 1.0
    %v371 = vsel %vm370, 1, 0
    %v372 = vcvt.s32.f32 %v371
    %v373 = vmul.f32 %v330, 0.95122945
    %v374 = vmul.f32 %v372, 0.048770577
    %v375 = vadd.f32 %v373, %v374
    %377 = vrot.lane.b32.xlu0 %v372, 32
    %v378 = vpop.permute.xlu0 %377
    %380 = vst.msk [vmem:[#allocation8 + $0x4] sm:$0xf] %vm188, %v378
    %382 = vrot.lane.b32.xlu0 %v375, 32
    %v383 = vpop.permute.xlu0 %382
    %385 = vst.msk [vmem:[#allocation10 + $0x4] sm:$0xf] %vm188, %v383
    %v386 = vsel %vm100, %v372, 0
    %388 = vmatpush.msra.mxu0 0.0
    %389 = vmatpush.msra.mxu0 0.0
    %390 = vmatpush.msra.mxu0 0.0
    %391 = vmatpush.msra.mxu0 0.0
    %392 = vmatpush.msra.mxu0 0.0
    %393 = vmatpush.msra.mxu0 0.0
    %394 = vmatpush.msra.mxu0 0.0
    %395 = vmatpush.msra.mxu0 0.0
    %396 = vmatpush.msra.mxu0 0.0
    %397 = vmatpush.msra.mxu0 0.0
    %398 = vmatpush.msra.mxu0 0.0
    %399 = vmatpush.msra.mxu0 0.0
    %400 = vmatpush.msra.mxu0 %v90
    %401 = vmatpush.msra.mxu0 %v89
    %402 = vmatpush.msra.mxu0 %v88
    %403 = vmatpush.msra.mxu0 %v87
    %404 = vmatmul.f32.gmra.mxu0 %v386
    %v405 = vpop.f32.mrf.mxu0
    %v406 = vadd.f32 0.0, %v405
    %407 = vdwg.mxu0
    %v408 = vadd.f32 %v85, %v406
    %v409 = vadd.f32 %v366, %v408
    %410 = vrot.lane.b32.xlu0 %v409, 96
    %v411 = vpop.permute.xlu0 %410
    %v412 = vmul.f32 %v411, %v95
    %v413 = vmul.f32 %v369, 0.95122945
    %v414 = vadd.f32 %v413, %v409
    %v415 = vsub.f32 %v414, %v372
    %vm416 = vcmp.gt.f32.partialorder %v415, 1.0
    %v417 = vsel %vm416, 1, 0
    %v418 = vcvt.s32.f32 %v417
    %v419 = vmul.f32 %v375, 0.95122945
    %v420 = vmul.f32 %v418, 0.048770577
    %v421 = vadd.f32 %v419, %v420
    %423 = vrot.lane.b32.xlu0 %v418, 64
    %v424 = vpop.permute.xlu0 %423
    %426 = vst.msk [vmem:[#allocation8 + $0x4] sm:$0xf] %vm235, %v424
    %428 = vrot.lane.b32.xlu0 %v421, 64
    %v429 = vpop.permute.xlu0 %428
    %431 = vst.msk [vmem:[#allocation10 + $0x4] sm:$0xf] %vm235, %v429
    %v432 = vsel %vm100, %v418, 0
    %434 = vmatpush.msra.mxu0 0.0
    %435 = vmatpush.msra.mxu0 0.0
    %436 = vmatpush.msra.mxu0 0.0
    %437 = vmatpush.msra.mxu0 0.0
    %438 = vmatpush.msra.mxu0 0.0
    %439 = vmatpush.msra.mxu0 0.0
    %440 = vmatpush.msra.mxu0 0.0
    %441 = vmatpush.msra.mxu0 0.0
    %442 = vmatpush.msra.mxu0 0.0
    %443 = vmatpush.msra.mxu0 0.0
    %444 = vmatpush.msra.mxu0 0.0
    %445 = vmatpush.msra.mxu0 0.0
    %446 = vmatpush.msra.mxu0 %v90
    %447 = vmatpush.msra.mxu0 %v89
    %448 = vmatpush.msra.mxu0 %v88
    %449 = vmatpush.msra.mxu0 %v87
    %450 = vmatmul.f32.gmra.mxu0 %v432
    %v451 = vpop.f32.mrf.mxu0
    %v452 = vadd.f32 0.0, %v451
    %453 = vdwg.mxu0
    %v455 = vrot.slane %v452, 4
    %v457 = vadd.f32 %v85, %v455
    %v459 = vrot.slane %v457, 4
    %v461 = vadd.f32 %v412, %v459
    %462 = vrot.lane.b32.xlu0 %v461, 96
    %v463 = vpop.permute.xlu0 %462
    %v464 = vmul.f32 %v463, %v95
    %v465 = vmul.f32 %v415, 0.95122945
    %v466 = vadd.f32 %v465, %v461
    %v467 = vsub.f32 %v466, %v418
    %vm468 = vcmp.gt.f32.partialorder %v467, 1.0
    %v469 = vsel %vm468, 1, 0
    %v470 = vcvt.s32.f32 %v469
    %v471 = vmul.f32 %v421, 0.95122945
    %v472 = vmul.f32 %v470, 0.048770577
    %v473 = vadd.f32 %v471, %v472
    %475 = vrot.lane.b32.xlu0 %v470, 96
    %v476 = vpop.permute.xlu0 %475
    %478 = vst.msk [vmem:[#allocation8 + $0x4] sm:$0xf] %vm288, %v476
    %480 = vrot.lane.b32.xlu0 %v473, 96
    %v481 = vpop.permute.xlu0 %480
    %483 = vst.msk [vmem:[#allocation10 + $0x4] sm:$0xf] %vm288, %v481
    %484 = vst.msk [vmem:[#allocation2] sm:$0xf] %vm138, %v470
    %485 = vst.msk [vmem:[#allocation3] sm:$0xf] %vm138, %v467
    %486 = vst.msk [vmem:[#allocation4] sm:$0xf] %vm138, %v473
    %487 = vst [vmem:[#allocation5] sm:$0xf] %v464
    // Predicated region
    $region26: #{tpu_custom_call.1} parent=1 // pred_check
      %p488 = pneg %p30
    $region27: #{tpu_custom_call.1} parent=1 // pred_check_branch
      %490 = sbr.rel (%p488) target = $region29
    $region28: #{tpu_custom_call.1} parent=1 // pred_region
      %v491 = vld [vmem:[%s3] sm:$0xff]
      %v492 = vld [vmem:[%s3 + $0x8] sm:$0xff]
      %v493 = vld [vmem:[%s3 + $0x10] sm:$0xff]
      %v494 = vld [vmem:[%s3 + $0x18] sm:$0xff]
      %v495 = vld [vmem:[%s4] sm:$0x1]
      %v497 = vperm.slane %v495, 0
      %v499 = vsel %vm100, %v473, 0
      %501 = vmatpush.msra.mxu0 0.0
      %502 = vmatpush.msra.mxu0 0.0
      %503 = vmatpush.msra.mxu0 0.0
      %504 = vmatpush.msra.mxu0 0.0
      %505 = vmatpush.msra.mxu0 0.0
      %506 = vmatpush.msra.mxu0 0.0
      %507 = vmatpush.msra.mxu0 0.0
      %508 = vmatpush.msra.mxu0 0.0
      %509 = vmatpush.msra.mxu0 0.0
      %510 = vmatpush.msra.mxu0 0.0
      %511 = vmatpush.msra.mxu0 0.0
      %512 = vmatpush.msra.mxu0 0.0
      %513 = vmatpush.msra.mxu0 %v494
      %514 = vmatpush.msra.mxu0 %v493
      %515 = vmatpush.msra.mxu0 %v492
      %516 = vmatpush.msra.mxu0 %v491
      %517 = vmatmul.f32.gmra.mxu0 %v499
      %v518 = vpop.f32.mrf.mxu0
      %v519 = vadd.f32 %v497, %v518
      %520 = vdwg.mxu0
      %vm521 = vcmask 60416
      %522 = vst.msk [vmem:[#allocation6] sm:$0xf] %vm521, %v519
      %523 = vst.msk [vmem:[#allocation11] sm:$0xf] %vm138, %v470
      %524 = vst.msk [vmem:[#allocation13] sm:$0xf] %vm138, %v467
      %525 = vst [vmem:[#allocation14] sm:$0xf] %v464
    $region29: #{tpu_custom_call.1} parent=1 // pred_fallthru
      _
    // Predicated region
    $region30: #{tpu_custom_call.1} parent=1 // pred_check
      _
    $region31: #{tpu_custom_call.1} parent=1 // pred_check_branch
      %527 = sbr.rel (0) target = $region33
    $region32: #{tpu_custom_call.1} parent=1 // pred_region
      %529 = vsyncadd [#allocation7], 0
      %s531 = sshll.u32 [#allocation6], 4
      %s532 = int_to_ptr.vmem [resolvable:$true] %s531
      %s533 = sshll.u32 %s5, 4
      %s534 = int_to_ptr.hbm [resolvable:$true] %s533
      %536 = dma.vmem_to_hbm [thread:$0]  %s532, 64, %s534, [#allocation7]
    $region33: #{tpu_custom_call.1} parent=1 // pred_fallthru
      _
    // Predicated region
    $region34: #{tpu_custom_call.1} parent=1 // pred_check
      _
    $region35: #{tpu_custom_call.1} parent=1 // pred_check_branch
      %538 = sbr.rel (0) target = $region37
    $region36: #{tpu_custom_call.1} parent=1 // pred_region
      %540 = vsyncadd [#allocation9], 0
      %s542 = sshll.u32 [#allocation8], 4
      %s543 = int_to_ptr.vmem [resolvable:$true] %s542
      %s544 = sshll.u32 %s6, 4
      %s545 = int_to_ptr.hbm [resolvable:$true] %s544
      %547 = dma.vmem_to_hbm [thread:$0]  %s543, 128, %s545, [#allocation9]
    $region37: #{tpu_custom_call.1} parent=1 // pred_fallthru
      _
    // Predicated region
    $region38: #{tpu_custom_call.1} parent=1 // pred_check
      _
    $region39: #{tpu_custom_call.1} parent=1 // pred_check_branch
      %549 = sbr.rel (0) target = $region41
    $region40: #{tpu_custom_call.1} parent=1 // pred_region
      %551 = vsyncadd [#allocation9], 0
      %s553 = sshll.u32 [#allocation10], 4
      %s554 = int_to_ptr.vmem [resolvable:$true] %s553
      %s555 = sshll.u32 %s7, 4
      %s556 = int_to_ptr.hbm [resolvable:$true] %s555
      %558 = dma.vmem_to_hbm [thread:$0]  %s554, 128, %s556, [#allocation9]
    $region41: #{tpu_custom_call.1} parent=1 // pred_fallthru
      _
    // Predicated region
    $region42: #{tpu_custom_call.1} parent=1 // pred_check
      _
    $region43: #{tpu_custom_call.1} parent=1 // pred_check_branch
      %560 = sbr.rel (0) target = $region45
    $region44: #{tpu_custom_call.1} parent=1 // pred_region
      %562 = vsyncadd [#allocation12], 0
      %s564 = sshll.u32 [#allocation11], 4
      %s565 = int_to_ptr.vmem [resolvable:$true] %s564
      %s566 = sshll.u32 %s8, 4
      %s567 = int_to_ptr.hbm [resolvable:$true] %s566
      %569 = dma.vmem_to_hbm [thread:$0]  %s565, 64, %s567, [#allocation12]
    $region45: #{tpu_custom_call.1} parent=1 // pred_fallthru
      _
    // Predicated region
    $region46: #{tpu_custom_call.1} parent=1 // pred_check
      _
    $region47: #{tpu_custom_call.1} parent=1 // pred_check_branch
      %571 = sbr.rel (0) target = $region49
    $region48: #{tpu_custom_call.1} parent=1 // pred_region
      %573 = vsyncadd [#allocation12], 0
      %s575 = sshll.u32 [#allocation13], 4
      %s576 = int_to_ptr.vmem [resolvable:$true] %s575
      %s577 = sshll.u32 %s9, 4
      %s578 = int_to_ptr.hbm [resolvable:$true] %s577
      %580 = dma.vmem_to_hbm [thread:$0]  %s576, 64, %s578, [#allocation12]
    $region49: #{tpu_custom_call.1} parent=1 // pred_fallthru
      _
    // Predicated region
    $region50: #{tpu_custom_call.1} parent=1 // pred_check
      _
    $region51: #{tpu_custom_call.1} parent=1 // pred_check_branch
      %582 = sbr.rel (0) target = $region53
    $region52: #{tpu_custom_call.1} parent=1 // pred_region
      %584 = vsyncadd [#allocation15], 0
      %s586 = sshll.u32 [#allocation14], 4
      %s587 = int_to_ptr.vmem [resolvable:$true] %s586
      %s588 = sshll.u32 %s10, 4
      %s589 = int_to_ptr.hbm [resolvable:$true] %s588
      %591 = dma.vmem_to_hbm [thread:$0]  %s587, 64, %s589, [#allocation15]
    $region53: #{tpu_custom_call.1} parent=1 // pred_fallthru
      _
    // Predicated region
    $region54: #{tpu_custom_call.1} parent=1 // pred_check
      _
    $region55: #{tpu_custom_call.1} parent=1 // pred_check_branch
      %593 = sbr.rel (0) target = $region57
    $region56: #{tpu_custom_call.1} parent=1 // pred_region
      %595 = dma.done [#allocation7], 64
    $region57: #{tpu_custom_call.1} parent=1 // pred_fallthru
      _
    // Predicated region
    $region58: #{tpu_custom_call.1} parent=1 // pred_check
      _
    $region59: #{tpu_custom_call.1} parent=1 // pred_check_branch
      %597 = sbr.rel (0) target = $region61
    $region60: #{tpu_custom_call.1} parent=1 // pred_region
      %599 = dma.done [#allocation9], 128
    $region61: #{tpu_custom_call.1} parent=1 // pred_fallthru
      _
    // Predicated region
    $region62: #{tpu_custom_call.1} parent=1 // pred_check
      _
    $region63: #{tpu_custom_call.1} parent=1 // pred_check_branch
      %601 = sbr.rel (0) target = $region65
    $region64: #{tpu_custom_call.1} parent=1 // pred_region
      %603 = dma.done [#allocation9], 128
    $region65: #{tpu_custom_call.1} parent=1 // pred_fallthru
      _
    // Predicated region
    $region66: #{tpu_custom_call.1} parent=1 // pred_check
      _
    $region67: #{tpu_custom_call.1} parent=1 // pred_check_branch
      %605 = sbr.rel (0) target = $region69
    $region68: #{tpu_custom_call.1} parent=1 // pred_region
      %607 = dma.done [#allocation12], 64
    $region69: #{tpu_custom_call.1} parent=1 // pred_fallthru
      _
    // Predicated region
    $region70: #{tpu_custom_call.1} parent=1 // pred_check
      _
    $region71: #{tpu_custom_call.1} parent=1 // pred_check_branch
      %609 = sbr.rel (0) target = $region73
    $region72: #{tpu_custom_call.1} parent=1 // pred_region
      %611 = dma.done [#allocation12], 64
    $region73: #{tpu_custom_call.1} parent=1 // pred_fallthru
      _
    // Predicated region
    $region74: #{tpu_custom_call.1} parent=1 // pred_check
      _
    $region75: #{tpu_custom_call.1} parent=1 // pred_check_branch
      %613 = sbr.rel (0) target = $region77
    $region76: #{tpu_custom_call.1} parent=1 // pred_region
      %615 = dma.done [#allocation15], 64
    $region77: #{tpu_custom_call.1} parent=1 // pred_fallthru
      _
    %616 = vsyncpa [#allocation7], 1
    %617 = vsyncpa [#allocation9], 1
    %618 = vsyncpa [#allocation12], 1
    %619 = vsyncpa [#allocation15], 1

</llo_original>
